<compile_context>
chip_gen: v5e
topology: v5e:2x2
jax: 0.10.0
libtpu: 0.0.40
codegen_flags: <defaults>
</compile_context>

<pallas_src>
import functools

import jax
import jax.numpy as jnp
from jax.experimental import pallas as pl
from jax.experimental.pallas import tpu as pltpu

# ----------------------------- configuration --------------------------------
D_MODEL = 32                      # small d_model for the example
STOCK_F, NEWS_F, EMP_F = 15, 10, 8
HORIZONS = (30, 180, 365, 730)
N_HEADS_OUT = len(HORIZONS)
PACKED_F = 4 * D_MODEL            # stock | text | employment | fused (= 128 lanes)
TARGET_ROWS = 4096                # (batch*seq) rows per grid step


def _round_up(x, m):
  return (x + m - 1) // m * m


def _choose_tb(batch, s_pad, target_rows=TARGET_ROWS):
  """Batch-tile size.  No divisibility requirement (wrapper pads the batch)
  and no forced >=2 grid tiles for tiny problems (single-TC chips)."""
  tb = max(1, target_rows // s_pad)
  return min(tb, batch)


# ------------------------------- kernel -------------------------------------
def _mmstock_kernel(stock_ref, news_ref, emp_ref,
                    ws1_ref, wt1_ref, we1_ref,
                    w2_ref, wh_ref, b_ref, bh_ref,
                    packed_ref, pred_ref):
  tb, ts, _ = stock_ref.shape
  rows = tb * ts

  w2 = w2_ref[...]          # [4*D, D] row blocks: ws2 | wt2 | we2 | wo
  b = b_ref[...]            # [8, D]  rows: bs1, bs2, bt1, bt2, be1, be2, bo, 0

  def encode(x2d, w1, b1, w2_blk, b2):
    h = jnp.dot(x2d, w1, preferred_element_type=jnp.float32) + b1
    h = jnp.maximum(h, 0.0)                     # ReLU; Dropout == identity (eval)
    return jnp.dot(h, w2_blk, preferred_element_type=jnp.float32) + b2

  def encode_modality(ref, f, w1, b1, w2_blk, b2):
    x = ref[...]
    if x.shape[1] == ts:                        # per-timestep modality [tb, ts, f]
      return encode(x.reshape(rows, f), w1, b1, w2_blk, b2)
    # Per-batch modality [tb, 1, f]: encode one row per batch element, then
    # broadcast the *encodings* (hoists the encoder work out of the seq loop).
    enc_b = encode(x.reshape(tb, f), w1, b1, w2_blk, b2)            # [tb, D]
    return jnp.broadcast_to(enc_b[:, None, :],
                            (tb, ts, D_MODEL)).reshape(rows, D_MODEL)

  s = encode(stock_ref[...].reshape(rows, STOCK_F), ws1_ref[...],
             b[0:1], w2[0 * D_MODEL:1 * D_MODEL], b[1:2])           # [rows, D]
  t = encode_modality(news_ref, NEWS_F, wt1_ref[...],
                      b[2:3], w2[1 * D_MODEL:2 * D_MODEL], b[3:4])  # [rows, D]
  e = encode_modality(emp_ref, EMP_F, we1_ref[...],
                      b[4:5], w2[2 * D_MODEL:3 * D_MODEL], b[5:6])  # [rows, D]

  # --- cross-modal attention per token (stock = query; 3 keys/values) ---
  # TODO(synk): stand-in for MultiModalFusionLayer ('cross_attention').
  scale = 1.0 / jnp.sqrt(jnp.float32(D_MODEL))
  a_s = jnp.sum(s * s, axis=-1, keepdims=True) * scale              # [rows, 1]
  a_t = jnp.sum(s * t, axis=-1, keepdims=True) * scale
  a_e = jnp.sum(s * e, axis=-1, keepdims=True) * scale
  m = jnp.maximum(jnp.maximum(a_s, a_t), a_e)
  es = jnp.exp(a_s - m)
  et = jnp.exp(a_t - m)
  ee = jnp.exp(a_e - m)
  inv = pl.reciprocal(es + et + ee, approx=True)                    # EUP slot
  ctx = (es * s + et * t + ee * e) * inv                            # [rows, D]

  fused = jnp.dot(ctx, w2[3 * D_MODEL:4 * D_MODEL],
                  preferred_element_type=jnp.float32) + b[6:7]      # [rows, D]

  # One lane-dense [rows, 128] store (unmasked vst) instead of 4 masked stores.
  packed = jnp.concatenate([s, t, e, fused], axis=-1)               # [rows, 128]
  packed_ref[...] = packed.reshape(tb, ts, PACKED_F).astype(packed_ref.dtype)

  # --- multi-horizon prediction heads, folded through the output projection:
  # preds = fused @ wp + bp == ctx @ (wo @ wp) + (bo @ wp + bp) = ctx @ wh + bh
  # (issues from ctx directly; no serial fused->preds dependency on the MXU).
  # TODO(synk): stand-in for MultiTaskPredictionHead.
  preds = jnp.dot(ctx, wh_ref[...],
                  preferred_element_type=jnp.float32) + bh_ref[...]
  pred_ref[...] = preds.reshape(tb, ts, N_HEADS_OUT)


# ------------------------------ wrapper --------------------------------------
@functools.partial(jax.jit, static_argnames=("packed_dtype",))
def multimodal_stock_forward(params, stock, news, employment,
                             packed_dtype=jnp.float32):
  """stock: [B,S,15]; news: [B,10] or [B,S,10]; employment: [B,8] or [B,S,8].

  packed_dtype=jnp.bfloat16 halves the dominant output-writeback HBM traffic
  (use if downstream consumers tolerate bf16 encodings)."""
  B, S, _ = stock.shape
  S_pad = _round_up(S, 8)
  tb = _choose_tb(B, S_pad)
  n_tiles = pl.cdiv(B, tb)
  B_pad = n_tiles * tb

  def prep_seq(x):                      # [B,S,F] -> f32 [B_pad,S_pad,F]
    x = x.astype(jnp.float32)
    return jnp.pad(x, ((0, B_pad - B), (0, S_pad - S), (0, 0)))

  def prep_modality(x):
    # Per-batch modalities stay [B_pad,1,F]: never materialized over seq in
    # HBM; the kernel encodes per-batch and broadcasts only the encodings.
    if x.ndim == 2:
      x = x.astype(jnp.float32)[:, None, :]
      return jnp.pad(x, ((0, B_pad - B), (0, 0), (0, 0))), 1
    return prep_seq(x), S_pad

  stock_p = prep_seq(stock)
  news_p, news_ts = prep_modality(news)
  emp_p, emp_ts = prep_modality(employment)

  def row_spec(ts, f):
    return pl.BlockSpec((tb, ts, f), lambda i: (i, 0, 0))

  def param_spec(r, c):
    return pl.BlockSpec((r, c), lambda i: (0, 0))

  in_specs = [
      row_spec(S_pad, STOCK_F),
      row_spec(news_ts, NEWS_F),
      row_spec(emp_ts, EMP_F),
      param_spec(STOCK_F, D_MODEL),            # ws1
      param_spec(NEWS_F, D_MODEL),             # wt1
      param_spec(EMP_F, D_MODEL),              # we1
      param_spec(4 * D_MODEL, D_MODEL),        # w2 slab (ws2|wt2|we2|wo)
      param_spec(D_MODEL, N_HEADS_OUT),        # wh = wo @ wp (folded head)
      param_spec(8, D_MODEL),                  # bias slab
      param_spec(1, N_HEADS_OUT),              # bh = bo @ wp + bp
  ]
  out_specs = [
      row_spec(S_pad, PACKED_F),
      row_spec(S_pad, N_HEADS_OUT),
  ]
  out_shape = [
      jax.ShapeDtypeStruct((B_pad, S_pad, PACKED_F), packed_dtype),
      jax.ShapeDtypeStruct((B_pad, S_pad, N_HEADS_OUT), jnp.float32),
  ]

  packed, preds = pl.pallas_call(
      _mmstock_kernel,
      out_shape=out_shape,
      grid=(n_tiles,),
      in_specs=in_specs,
      out_specs=out_specs,
      compiler_params=pltpu.CompilerParams(
          dimension_semantics=("parallel",),
          vmem_limit_bytes=32 * 1024 * 1024,
      ),
  )(
      stock_p, news_p, emp_p,
      params["ws1"], params["wt1"], params["we1"],
      params["w2"], params["wh"], params["b"], params["bh"],
  )

  packed = packed[:B, :S, :]
  preds = preds[:B, :S, :]
  stock_enc = packed[..., 0 * D_MODEL:1 * D_MODEL]
  text_enc = packed[..., 1 * D_MODEL:2 * D_MODEL]
  emp_enc = packed[..., 2 * D_MODEL:3 * D_MODEL]
  fused = packed[..., 3 * D_MODEL:4 * D_MODEL]
  predictions = {
      f"horizon_{h}": preds[..., i:i + 1] for i, h in enumerate(HORIZONS)
  }
  return {
      "predictions": predictions,
      "fusion_output": {"fused_features": fused},
      "encoded_features": {
          "stock": stock_enc,
          "text": text_enc,
          "employment": emp_enc,
      },
  }


# --------------------------- parameter init / packing ------------------------
def init_params(key):
  """PyTorch-style init with the same per-layer shapes as the nn.Module."""
  def lin(k, fan_in, fan_out):
    kw, kb = jax.random.split(k)
    bound = 1.0 / jnp.sqrt(jnp.float32(fan_in))
    w = jax.random.uniform(kw, (fan_in, fan_out), jnp.float32, -bound, bound)
    b = jax.random.uniform(kb, (1, fan_out), jnp.float32, -bound, bound)
    return w, b

  keys = jax.random.split(key, 8)
  ws1, bs1 = lin(keys[0], STOCK_F, D_MODEL)
  ws2, bs2 = lin(keys[1], D_MODEL, D_MODEL)
  wt1, bt1 = lin(keys[2], NEWS_F, D_MODEL)
  wt2, bt2 = lin(keys[3], D_MODEL, D_MODEL)
  we1, be1 = lin(keys[4], EMP_F, D_MODEL)
  we2, be2 = lin(keys[5], D_MODEL, D_MODEL)
  wo, bo = lin(keys[6], D_MODEL, D_MODEL)
  wp, bp = lin(keys[7], D_MODEL, N_HEADS_OUT)
  return dict(ws1=ws1, bs1=bs1, ws2=ws2, bs2=bs2,
              wt1=wt1, bt1=bt1, wt2=wt2, bt2=bt2,
              we1=we1, be1=be1, we2=we2, be2=be2,
              wo=wo, bo=bo, wp=wp, bp=bp)


def pack_params(p):
  """Consolidate the 16 per-layer params into 7 kernel inputs.

  The prediction head is folded through the output projection so the kernel
  computes preds directly from ctx:  wh = wo @ wp,  bh = bo @ wp + bp.
  """
  w2 = jnp.concatenate([p["ws2"], p["wt2"], p["we2"], p["wo"]], axis=0)   # [128, 32]
  b = jnp.concatenate([p["bs1"], p["bs2"], p["bt1"], p["bt2"],
                       p["be1"], p["be2"], p["bo"],
                       jnp.zeros((1, D_MODEL), jnp.float32)], axis=0)     # [8, 32]
  wh = p["wo"] @ p["wp"]                                                  # [32, 4]
  bh = p["bo"] @ p["wp"] + p["bp"]                                        # [1, 4]
  return dict(ws1=p["ws1"], wt1=p["wt1"], we1=p["we1"],
              w2=w2, wh=wh, b=b, bh=bh)


# ----------------------------- pure-JAX reference -----------------------------
def _reference_forward(p, stock, news, employment):
  """Plain-jnp reference of the same forward (for a correctness check)."""
  B, S, _ = stock.shape
  if news.ndim == 2:
    news = jnp.broadcast_to(news[:, None, :], (B, S, NEWS_F))
  if employment.ndim == 2:
    employment = jnp.broadcast_to(employment[:, None, :], (B, S, EMP_F))

  def enc(x, w1, b1, w2, b2):
    return jnp.maximum(x @ w1 + b1, 0.0) @ w2 + b2

  s = enc(stock, p["ws1"], p["bs1"], p["ws2"], p["bs2"])
  t = enc(news, p["wt1"], p["bt1"], p["wt2"], p["bt2"])
  e = enc(employment, p["we1"], p["be1"], p["we2"], p["be2"])
  scale = 1.0 / jnp.sqrt(jnp.float32(D_MODEL))
  a = jnp.stack([jnp.sum(s * s, -1), jnp.sum(s * t, -1), jnp.sum(s * e, -1)],
                axis=-1) * scale
  w = jax.nn.softmax(a, axis=-1)
  ctx = (w[..., 0:1] * s + w[..., 1:2] * t + w[..., 2:3] * e)
  fused = ctx @ p["wo"] + p["bo"]
  preds = fused @ p["wp"] + p["bp"]
  return s, t, e, fused, preds


# --------------------------------- main ---------------------------------------
if __name__ == "__main__":
  B, S = 2, 8
  root = jax.random.PRNGKey(0)
  kp, ks, kn, ke = jax.random.split(root, 4)

  raw_params = init_params(kp)
  params = pack_params(raw_params)
  stock = jax.random.normal(ks, (B, S, STOCK_F), jnp.float32)
  news = jax.random.normal(kn, (B, NEWS_F), jnp.float32)        # 2-D -> per-batch path
  employment = jax.random.normal(ke, (B, EMP_F), jnp.float32)   # 2-D -> per-batch path

  out = multimodal_stock_forward(params, stock, news, employment)
  jax.block_until_ready(out)

  # shape checks
  assert out["fusion_output"]["fused_features"].shape == (B, S, D_MODEL)
  assert out["encoded_features"]["stock"].shape == (B, S, D_MODEL)
  assert out["encoded_features"]["text"].shape == (B, S, D_MODEL)
  assert out["encoded_features"]["employment"].shape == (B, S, D_MODEL)
  assert out["predictions"]["horizon_30"].shape == (B, S, 1)
  assert len(out["predictions"]) == len(HORIZONS)
  assert all(bool(jnp.isfinite(v).all())
             for v in jax.tree_util.tree_leaves(out))

  # numerical check vs. a plain-jnp reference (approx reciprocal -> loose tol)
  s_ref, t_ref, e_ref, fused_ref, preds_ref = _reference_forward(
      raw_params, stock, news, employment)
  preds_kernel = jnp.concatenate(
      [out["predictions"][f"horizon_{h}"] for h in HORIZONS], axis=-1)
  for name, got, ref in [
      ("stock", out["encoded_features"]["stock"], s_ref),
      ("text", out["encoded_features"]["text"], t_ref),
      ("employment", out["encoded_features"]["employment"], e_ref),
      ("fused", out["fusion_output"]["fused_features"], fused_ref),
      ("preds", preds_kernel, preds_ref),
  ]:
    err = float(jnp.max(jnp.abs(got.astype(jnp.float32) - ref)))
    assert err < 5e-3, f"{name} mismatch: max|diff|={err}"

  print("KERNEL_OK")
</pallas_src>

<mosaic_0001>
module attributes {stable_mosaic.version = 11 : i64} {
  func.func @_mmstock_kernel(%arg0: i32, %arg1: memref<2x8x15xf32, #tpu.memory_space<vmem>>, %arg2: memref<2x1x10xf32, #tpu.memory_space<vmem>>, %arg3: memref<2x1x8xf32, #tpu.memory_space<vmem>>, %arg4: memref<15x32xf32, #tpu.memory_space<vmem>>, %arg5: memref<10x32xf32, #tpu.memory_space<vmem>>, %arg6: memref<8x32xf32, #tpu.memory_space<vmem>>, %arg7: memref<128x32xf32, #tpu.memory_space<vmem>>, %arg8: memref<32x4xf32, #tpu.memory_space<vmem>>, %arg9: memref<8x32xf32, #tpu.memory_space<vmem>>, %arg10: memref<1x4xf32, #tpu.memory_space<vmem>>, %arg11: memref<2x8x128xf32, #tpu.memory_space<vmem>>, %arg12: memref<2x8x4xf32, #tpu.memory_space<vmem>>) attributes {dimension_semantics = [#tpu.dimension_semantics<parallel>], iteration_bounds = array<i64: 1>, scalar_prefetch = 0 : i64, scratch_operands = 0 : i64, tpu.core_type = #tpu.core_type<tc>, window_params = [{transform_indices = @transform_0, window_bounds = array<i64: 2, 8, 15>}, {transform_indices = @transform_1, window_bounds = array<i64: 2, 1, 10>}, {transform_indices = @transform_2, window_bounds = array<i64: 2, 1, 8>}, {pipeline_mode = #tpu.pipeline_mode<synchronous>, transform_indices = @transform_3, window_bounds = array<i64: 15, 32>}, {pipeline_mode = #tpu.pipeline_mode<synchronous>, transform_indices = @transform_4, window_bounds = array<i64: 10, 32>}, {pipeline_mode = #tpu.pipeline_mode<synchronous>, transform_indices = @transform_5, window_bounds = array<i64: 8, 32>}, {pipeline_mode = #tpu.pipeline_mode<synchronous>, transform_indices = @transform_6, window_bounds = array<i64: 128, 32>}, {pipeline_mode = #tpu.pipeline_mode<synchronous>, transform_indices = @transform_7, window_bounds = array<i64: 32, 4>}, {pipeline_mode = #tpu.pipeline_mode<synchronous>, transform_indices = @transform_8, window_bounds = array<i64: 8, 32>}, {pipeline_mode = #tpu.pipeline_mode<synchronous>, transform_indices = @transform_9, window_bounds = array<i64: 1, 4>}, {transform_indices = @transform_10, window_bounds = array<i64: 2, 8, 128>}, {transform_indices = @transform_11, window_bounds = array<i64: 2, 8, 4>}]} {
    %c0 = arith.constant 0 : index
    %c0_0 = arith.constant 0 : index
    %0 = vector.load %arg7[%c0, %c0_0] : memref<128x32xf32, #tpu.memory_space<vmem>>, vector<128x32xf32>
    %c0_1 = arith.constant 0 : index
    %c0_2 = arith.constant 0 : index
    %1 = vector.load %arg9[%c0_1, %c0_2] : memref<8x32xf32, #tpu.memory_space<vmem>>, vector<8x32xf32>
    %c0_3 = arith.constant 0 : index
    %c0_4 = arith.constant 0 : index
    %c0_5 = arith.constant 0 : index
    %2 = vector.load %arg1[%c0_3, %c0_4, %c0_5] : memref<2x8x15xf32, #tpu.memory_space<vmem>>, vector<2x8x15xf32>
    %3 = vector.shape_cast %2 : vector<2x8x15xf32> to vector<16x15xf32>
    %c0_6 = arith.constant 0 : index
    %c0_7 = arith.constant 0 : index
    %4 = vector.load %arg4[%c0_6, %c0_7] : memref<15x32xf32, #tpu.memory_space<vmem>>, vector<15x32xf32>
    %5 = vector.extract_strided_slice %1 {offsets = [0, 0], sizes = [1, 32], strides = [1, 1]} : vector<8x32xf32> to vector<1x32xf32>
    %6 = vector.extract_strided_slice %0 {offsets = [0, 0], sizes = [32, 32], strides = [1, 1]} : vector<128x32xf32> to vector<32x32xf32>
    %7 = vector.extract_strided_slice %1 {offsets = [1, 0], sizes = [1, 32], strides = [1, 1]} : vector<8x32xf32> to vector<1x32xf32>
    %cst = arith.constant dense<0.000000e+00> : vector<16x32xf32>
    %8 = tpu.matmul %3, %4, %cst {dimension_numbers = #tpu.dot_dimension_numbers<[1], [0], [0], [1], [0, 0, 1, 1], [], []>} : vector<16x15xf32>, vector<15x32xf32>, vector<16x32xf32> -> vector<16x32xf32>
    %9 = vector.broadcast %5 : vector<1x32xf32> to vector<16x32xf32>
    %10 = arith.addf %8, %9 : vector<16x32xf32>
    %cst_8 = arith.constant 0.000000e+00 : f32
    %11 = vector.broadcast %cst_8 : f32 to vector<16x32xf32>
    %12 = arith.maximumf %10, %11 : vector<16x32xf32>
    %cst_9 = arith.constant dense<0.000000e+00> : vector<16x32xf32>
    %13 = tpu.matmul %12, %6, %cst_9 {dimension_numbers = #tpu.dot_dimension_numbers<[1], [0], [0], [1], [0, 0, 1, 1], [], []>} : vector<16x32xf32>, vector<32x32xf32>, vector<16x32xf32> -> vector<16x32xf32>
    %14 = vector.broadcast %7 : vector<1x32xf32> to vector<16x32xf32>
    %15 = arith.addf %13, %14 : vector<16x32xf32>
    %c0_10 = arith.constant 0 : index
    %c0_11 = arith.constant 0 : index
    %16 = vector.load %arg5[%c0_10, %c0_11] : memref<10x32xf32, #tpu.memory_space<vmem>>, vector<10x32xf32>
    %17 = vector.extract_strided_slice %1 {offsets = [2, 0], sizes = [1, 32], strides = [1, 1]} : vector<8x32xf32> to vector<1x32xf32>
    %18 = vector.extract_strided_slice %0 {offsets = [32, 0], sizes = [32, 32], strides = [1, 1]} : vector<128x32xf32> to vector<32x32xf32>
    %19 = vector.extract_strided_slice %1 {offsets = [3, 0], sizes = [1, 32], strides = [1, 1]} : vector<8x32xf32> to vector<1x32xf32>
    %c0_12 = arith.constant 0 : index
    %c0_13 = arith.constant 0 : index
    %c0_14 = arith.constant 0 : index
    %20 = vector.load %arg2[%c0_12, %c0_13, %c0_14] : memref<2x1x10xf32, #tpu.memory_space<vmem>>, vector<2x1x10xf32>
    %21 = vector.shape_cast %20 : vector<2x1x10xf32> to vector<2x10xf32>
    %cst_15 = arith.constant dense<0.000000e+00> : vector<2x32xf32>
    %22 = tpu.matmul %21, %16, %cst_15 {dimension_numbers = #tpu.dot_dimension_numbers<[1], [0], [0], [1], [0, 0, 1, 1], [], []>} : vector<2x10xf32>, vector<10x32xf32>, vector<2x32xf32> -> vector<2x32xf32>
    %23 = vector.broadcast %17 : vector<1x32xf32> to vector<2x32xf32>
    %24 = arith.addf %22, %23 : vector<2x32xf32>
    %cst_16 = arith.constant 0.000000e+00 : f32
    %25 = vector.broadcast %cst_16 : f32 to vector<2x32xf32>
    %26 = arith.maximumf %24, %25 : vector<2x32xf32>
    %cst_17 = arith.constant dense<0.000000e+00> : vector<2x32xf32>
    %27 = tpu.matmul %26, %18, %cst_17 {dimension_numbers = #tpu.dot_dimension_numbers<[1], [0], [0], [1], [0, 0, 1, 1], [], []>} : vector<2x32xf32>, vector<32x32xf32>, vector<2x32xf32> -> vector<2x32xf32>
    %28 = vector.broadcast %19 : vector<1x32xf32> to vector<2x32xf32>
    %29 = arith.addf %27, %28 : vector<2x32xf32>
    %30 = vector.shape_cast %29 : vector<2x32xf32> to vector<2x1x32xf32>
    %31 = vector.shape_cast %30 : vector<2x1x32xf32> to vector<2x1x32xf32>
    %32 = vector.broadcast %31 : vector<2x1x32xf32> to vector<2x8x32xf32>
    %33 = vector.shape_cast %32 : vector<2x8x32xf32> to vector<16x32xf32>
    %c0_18 = arith.constant 0 : index
    %c0_19 = arith.constant 0 : index
    %34 = vector.load %arg6[%c0_18, %c0_19] : memref<8x32xf32, #tpu.memory_space<vmem>>, vector<8x32xf32>
    %35 = vector.extract_strided_slice %1 {offsets = [4, 0], sizes = [1, 32], strides = [1, 1]} : vector<8x32xf32> to vector<1x32xf32>
    %36 = vector.extract_strided_slice %0 {offsets = [64, 0], sizes = [32, 32], strides = [1, 1]} : vector<128x32xf32> to vector<32x32xf32>
    %37 = vector.extract_strided_slice %1 {offsets = [5, 0], sizes = [1, 32], strides = [1, 1]} : vector<8x32xf32> to vector<1x32xf32>
    %c0_20 = arith.constant 0 : index
    %c0_21 = arith.constant 0 : index
    %c0_22 = arith.constant 0 : index
    %38 = vector.load %arg3[%c0_20, %c0_21, %c0_22] : memref<2x1x8xf32, #tpu.memory_space<vmem>>, vector<2x1x8xf32>
    %39 = vector.shape_cast %38 : vector<2x1x8xf32> to vector<2x8xf32>
    %cst_23 = arith.constant dense<0.000000e+00> : vector<2x32xf32>
    %40 = tpu.matmul %39, %34, %cst_23 {dimension_numbers = #tpu.dot_dimension_numbers<[1], [0], [0], [1], [0, 0, 1, 1], [], []>} : vector<2x8xf32>, vector<8x32xf32>, vector<2x32xf32> -> vector<2x32xf32>
    %41 = vector.broadcast %35 : vector<1x32xf32> to vector<2x32xf32>
    %42 = arith.addf %40, %41 : vector<2x32xf32>
    %cst_24 = arith.constant 0.000000e+00 : f32
    %43 = vector.broadcast %cst_24 : f32 to vector<2x32xf32>
    %44 = arith.maximumf %42, %43 : vector<2x32xf32>
    %cst_25 = arith.constant dense<0.000000e+00> : vector<2x32xf32>
    %45 = tpu.matmul %44, %36, %cst_25 {dimension_numbers = #tpu.dot_dimension_numbers<[1], [0], [0], [1], [0, 0, 1, 1], [], []>} : vector<2x32xf32>, vector<32x32xf32>, vector<2x32xf32> -> vector<2x32xf32>
    %46 = vector.broadcast %37 : vector<1x32xf32> to vector<2x32xf32>
    %47 = arith.addf %45, %46 : vector<2x32xf32>
    %48 = vector.shape_cast %47 : vector<2x32xf32> to vector<2x1x32xf32>
    %49 = vector.shape_cast %48 : vector<2x1x32xf32> to vector<2x1x32xf32>
    %50 = vector.broadcast %49 : vector<2x1x32xf32> to vector<2x8x32xf32>
    %51 = vector.shape_cast %50 : vector<2x8x32xf32> to vector<16x32xf32>
    %cst_26 = arith.constant 3.200000e+01 : f32
    %52 = math.sqrt %cst_26 : f32
    %cst_27 = arith.constant 1.000000e+00 : f32
    %53 = arith.divf %cst_27, %52 : f32
    %54 = arith.mulf %15, %15 : vector<16x32xf32>
    %cst_28 = arith.constant dense<0.000000e+00> : vector<16xf32>
    %55 = vector.multi_reduction <add>, %54, %cst_28 [1] : vector<16x32xf32> to vector<16xf32>
    %56 = vector.shape_cast %55 : vector<16xf32> to vector<16x1xf32>
    %57 = vector.broadcast %53 : f32 to vector<16x1xf32>
    %58 = arith.mulf %56, %57 : vector<16x1xf32>
    %59 = arith.mulf %15, %33 : vector<16x32xf32>
    %cst_29 = arith.constant dense<0.000000e+00> : vector<16xf32>
    %60 = vector.multi_reduction <add>, %59, %cst_29 [1] : vector<16x32xf32> to vector<16xf32>
    %61 = vector.shape_cast %60 : vector<16xf32> to vector<16x1xf32>
    %62 = vector.broadcast %53 : f32 to vector<16x1xf32>
    %63 = arith.mulf %61, %62 : vector<16x1xf32>
    %64 = arith.mulf %15, %51 : vector<16x32xf32>
    %cst_30 = arith.constant dense<0.000000e+00> : vector<16xf32>
    %65 = vector.multi_reduction <add>, %64, %cst_30 [1] : vector<16x32xf32> to vector<16xf32>
    %66 = vector.shape_cast %65 : vector<16xf32> to vector<16x1xf32>
    %67 = vector.broadcast %53 : f32 to vector<16x1xf32>
    %68 = arith.mulf %66, %67 : vector<16x1xf32>
    %69 = arith.maximumf %58, %63 : vector<16x1xf32>
    %70 = arith.maximumf %69, %68 : vector<16x1xf32>
    %71 = arith.subf %58, %70 : vector<16x1xf32>
    %72 = math.exp %71 : vector<16x1xf32>
    %73 = arith.subf %63, %70 : vector<16x1xf32>
    %74 = math.exp %73 : vector<16x1xf32>
    %75 = arith.subf %68, %70 : vector<16x1xf32>
    %76 = math.exp %75 : vector<16x1xf32>
    %77 = arith.addf %72, %74 : vector<16x1xf32>
    %78 = arith.addf %77, %76 : vector<16x1xf32>
    %79 = tpu.reciprocal %78 {approx = true} : vector<16x1xf32> -> vector<16x1xf32>
    %80 = vector.broadcast %72 : vector<16x1xf32> to vector<16x32xf32>
    %81 = arith.mulf %80, %15 : vector<16x32xf32>
    %82 = vector.broadcast %74 : vector<16x1xf32> to vector<16x32xf32>
    %83 = arith.mulf %82, %33 : vector<16x32xf32>
    %84 = arith.addf %81, %83 : vector<16x32xf32>
    %85 = vector.broadcast %76 : vector<16x1xf32> to vector<16x32xf32>
    %86 = arith.mulf %85, %51 : vector<16x32xf32>
    %87 = arith.addf %84, %86 : vector<16x32xf32>
    %88 = vector.broadcast %79 : vector<16x1xf32> to vector<16x32xf32>
    %89 = arith.mulf %87, %88 : vector<16x32xf32>
    %90 = vector.extract_strided_slice %0 {offsets = [96, 0], sizes = [32, 32], strides = [1, 1]} : vector<128x32xf32> to vector<32x32xf32>
    %cst_31 = arith.constant dense<0.000000e+00> : vector<16x32xf32>
    %91 = tpu.matmul %89, %90, %cst_31 {dimension_numbers = #tpu.dot_dimension_numbers<[1], [0], [0], [1], [0, 0, 1, 1], [], []>} : vector<16x32xf32>, vector<32x32xf32>, vector<16x32xf32> -> vector<16x32xf32>
    %92 = vector.extract_strided_slice %1 {offsets = [6, 0], sizes = [1, 32], strides = [1, 1]} : vector<8x32xf32> to vector<1x32xf32>
    %93 = vector.broadcast %92 : vector<1x32xf32> to vector<16x32xf32>
    %94 = arith.addf %91, %93 : vector<16x32xf32>
    %95 = tpu.concatenate %15, %33, %51, %94 in 1 : vector<16x32xf32>, vector<16x32xf32>, vector<16x32xf32>, vector<16x32xf32> -> vector<16x128xf32>
    %96 = vector.shape_cast %95 : vector<16x128xf32> to vector<2x8x128xf32>
    %c0_32 = arith.constant 0 : index
    %c0_33 = arith.constant 0 : index
    %c0_34 = arith.constant 0 : index
    %97 = vector.load %arg11[%c0_32, %c0_33, %c0_34] : memref<2x8x128xf32, #tpu.memory_space<vmem>>, vector<2x8x128xf32>
    tpu.vector_store %arg11[%c0_32, %c0_33, %c0_34], %96 {strides = array<i32>} : memref<2x8x128xf32, #tpu.memory_space<vmem>>, vector<2x8x128xf32>,
    %c0_35 = arith.constant 0 : index
    %c0_36 = arith.constant 0 : index
    %98 = vector.load %arg8[%c0_35, %c0_36] : memref<32x4xf32, #tpu.memory_space<vmem>>, vector<32x4xf32>
    %cst_37 = arith.constant dense<0.000000e+00> : vector<16x4xf32>
    %99 = tpu.matmul %89, %98, %cst_37 {dimension_numbers = #tpu.dot_dimension_numbers<[1], [0], [0], [1], [0, 0, 1, 1], [], []>} : vector<16x32xf32>, vector<32x4xf32>, vector<16x4xf32> -> vector<16x4xf32>
    %c0_38 = arith.constant 0 : index
    %c0_39 = arith.constant 0 : index
    %100 = vector.load %arg10[%c0_38, %c0_39] : memref<1x4xf32, #tpu.memory_space<vmem>>, vector<1x4xf32>
    %101 = vector.broadcast %100 : vector<1x4xf32> to vector<16x4xf32>
    %102 = arith.addf %99, %101 : vector<16x4xf32>
    %103 = vector.shape_cast %102 : vector<16x4xf32> to vector<2x8x4xf32>
    %c0_40 = arith.constant 0 : index
    %c0_41 = arith.constant 0 : index
    %c0_42 = arith.constant 0 : index
    %104 = vector.load %arg12[%c0_40, %c0_41, %c0_42] : memref<2x8x4xf32, #tpu.memory_space<vmem>>, vector<2x8x4xf32>
    tpu.vector_store %arg12[%c0_40, %c0_41, %c0_42], %103 {strides = array<i32>} : memref<2x8x4xf32, #tpu.memory_space<vmem>>, vector<2x8x4xf32>,
    return
  }
  func.func @transform_0(%arg0: i32) -> (i32, i32, i32) {
    %c0_i32 = arith.constant 0 : i32
    %c0_i32_0 = arith.constant 0 : i32
    %c0_i32_1 = arith.constant 0 : i32
    return %arg0, %c0_i32, %c0_i32_0 : i32, i32, i32
  }
  func.func @transform_1(%arg0: i32) -> (i32, i32, i32) {
    %c0_i32 = arith.constant 0 : i32
    %c0_i32_0 = arith.constant 0 : i32
    %c0_i32_1 = arith.constant 0 : i32
    return %arg0, %c0_i32, %c0_i32_0 : i32, i32, i32
  }
  func.func @transform_2(%arg0: i32) -> (i32, i32, i32) {
    %c0_i32 = arith.constant 0 : i32
    %c0_i32_0 = arith.constant 0 : i32
    %c0_i32_1 = arith.constant 0 : i32
    return %arg0, %c0_i32, %c0_i32_0 : i32, i32, i32
  }
  func.func @transform_3(%arg0: i32) -> (i32, i32) {
    %c0_i32 = arith.constant 0 : i32
    %c0_i32_0 = arith.constant 0 : i32
    %c0_i32_1 = arith.constant 0 : i32
    return %c0_i32, %c0_i32_0 : i32, i32
  }
  func.func @transform_4(%arg0: i32) -> (i32, i32) {
    %c0_i32 = arith.constant 0 : i32
    %c0_i32_0 = arith.constant 0 : i32
    %c0_i32_1 = arith.constant 0 : i32
    return %c0_i32, %c0_i32_0 : i32, i32
  }
  func.func @transform_5(%arg0: i32) -> (i32, i32) {
    %c0_i32 = arith.constant 0 : i32
    %c0_i32_0 = arith.constant 0 : i32
    %c0_i32_1 = arith.constant 0 : i32
    return %c0_i32, %c0_i32_0 : i32, i32
  }
  func.func @transform_6(%arg0: i32) -> (i32, i32) {
    %c0_i32 = arith.constant 0 : i32
    %c0_i32_0 = arith.constant 0 : i32
    %c0_i32_1 = arith.constant 0 : i32
    return %c0_i32, %c0_i32_0 : i32, i32
  }
  func.func @transform_7(%arg0: i32) -> (i32, i32) {
    %c0_i32 = arith.constant 0 : i32
    %c0_i32_0 = arith.constant 0 : i32
    %c0_i32_1 = arith.constant 0 : i32
    return %c0_i32, %c0_i32_0 : i32, i32
  }
  func.func @transform_8(%arg0: i32) -> (i32, i32) {
    %c0_i32 = arith.constant 0 : i32
    %c0_i32_0 = arith.constant 0 : i32
    %c0_i32_1 = arith.constant 0 : i32
    return %c0_i32, %c0_i32_0 : i32, i32
  }
  func.func @transform_9(%arg0: i32) -> (i32, i32) {
    %c0_i32 = arith.constant 0 : i32
    %c0_i32_0 = arith.constant 0 : i32
    %c0_i32_1 = arith.constant 0 : i32
    return %c0_i32, %c0_i32_0 : i32, i32
  }
  func.func @transform_10(%arg0: i32) -> (i32, i32, i32) {
    %c0_i32 = arith.constant 0 : i32
    %c0_i32_0 = arith.constant 0 : i32
    %c0_i32_1 = arith.constant 0 : i32
    return %arg0, %c0_i32, %c0_i32_0 : i32, i32, i32
  }
  func.func @transform_11(%arg0: i32) -> (i32, i32, i32) {
    %c0_i32 = arith.constant 0 : i32
    %c0_i32_0 = arith.constant 0 : i32
    %c0_i32_1 = arith.constant 0 : i32
    return %arg0, %c0_i32, %c0_i32_0 : i32, i32, i32
  }
}

</mosaic_0001>

<llo_original>
// kernel: multimodal_stock_forward.1
$region0: #{multimodal_stock_forward.1}
  #allocation0 [shape = 'u32[]', space=smem, size = 0x4, offset = 0x4, fixed_abs, tag = 'smem constant byte address 0x4 - core index']
  #allocation1 [shape = 'u32[72,128]{1,0:T(1,128)}', space=vmem, size = 0x9000, scoped, tag = 'internal scratch']
  %s0 = inlined_call_operand.vmem [shape: f32[2,8,15], index: 0, kind: input, shape index: {}]
  %s1 = inlined_call_operand.vmem [shape: f32[2,1,10], index: 1, kind: input, shape index: {}]
  %s2 = inlined_call_operand.vmem [shape: f32[2,1,8], index: 2, kind: input, shape index: {}]
  %s3 = inlined_call_operand.vmem [shape: f32[15,32], index: 3, kind: input, shape index: {}]
  %s4 = inlined_call_operand.vmem [shape: f32[10,32], index: 4, kind: input, shape index: {}]
  %s5 = inlined_call_operand.vmem [shape: f32[8,32], index: 5, kind: input, shape index: {}]
  %s6 = inlined_call_operand.vmem [shape: f32[128,32], index: 6, kind: input, shape index: {}]
  %s7 = inlined_call_operand.vmem [shape: f32[32,4], index: 7, kind: input, shape index: {}]
  %s8 = inlined_call_operand.vmem [shape: f32[8,32], index: 8, kind: input, shape index: {}]
  %s9 = inlined_call_operand.vmem [shape: f32[1,4], index: 9, kind: input, shape index: {}]
  %s10 = inlined_call_operand.vmem [shape: f32[2,8,128], index: 10, kind: output, shape index: {0}]
  %s11 = inlined_call_operand.vmem [shape: f32[2,8,4], index: 11, kind: output, shape index: {1}]
  %12 = xla_tuple %s10, %s11
  %s13 = sld [smem:[#allocation0]]
  $region58: #{multimodal_stock_forward.1} parent=0
    _
  %s15 = ssub.s32 1, %s13
  %s16 = scalar_select 0, %s15, %s13
  // Predicated region
  $region2: #{multimodal_stock_forward.1} parent=0 // pred_check
    _
  $region3: #{multimodal_stock_forward.1} parent=0 // pred_check_branch
    %18 = sbr.rel (0) target = $region5
  $region4: #{multimodal_stock_forward.1} parent=0 // pred_region
    _
  $region5: #{multimodal_stock_forward.1} parent=0 // pred_fallthru
    _
  // Predicated region
  $region6: #{multimodal_stock_forward.1} parent=0 // pred_check
    _
  $region7: #{multimodal_stock_forward.1} parent=0 // pred_check_branch
    %20 = sbr.rel (0) target = $region9
  $region8: #{multimodal_stock_forward.1} parent=0 // pred_region
    _
  $region9: #{multimodal_stock_forward.1} parent=0 // pred_fallthru
    _
  // Predicated region
  $region10: #{multimodal_stock_forward.1} parent=0 // pred_check
    _
  $region11: #{multimodal_stock_forward.1} parent=0 // pred_check_branch
    %22 = sbr.rel (0) target = $region13
  $region12: #{multimodal_stock_forward.1} parent=0 // pred_region
    _
  $region13: #{multimodal_stock_forward.1} parent=0 // pred_fallthru
    _
  // Predicated region
  $region14: #{multimodal_stock_forward.1} parent=0 // pred_check
    _
  $region15: #{multimodal_stock_forward.1} parent=0 // pred_check_branch
    %24 = sbr.rel (0) target = $region17
  $region16: #{multimodal_stock_forward.1} parent=0 // pred_region
    _
  $region17: #{multimodal_stock_forward.1} parent=0 // pred_fallthru
    _
  // Predicated region
  $region18: #{multimodal_stock_forward.1} parent=0 // pred_check
    _
  $region19: #{multimodal_stock_forward.1} parent=0 // pred_check_branch
    %26 = sbr.rel (0) target = $region21
  $region20: #{multimodal_stock_forward.1} parent=0 // pred_region
    _
  $region21: #{multimodal_stock_forward.1} parent=0 // pred_fallthru
    _
  // Predicated region
  $region22: #{multimodal_stock_forward.1} parent=0 // pred_check
    _
  $region23: #{multimodal_stock_forward.1} parent=0 // pred_check_branch
    %28 = sbr.rel (0) target = $region25
  $region24: #{multimodal_stock_forward.1} parent=0 // pred_region
    _
  $region25: #{multimodal_stock_forward.1} parent=0 // pred_fallthru
    _
  // Predicated region
  $region26: #{multimodal_stock_forward.1} parent=0 // pred_check
    _
  $region27: #{multimodal_stock_forward.1} parent=0 // pred_check_branch
    %30 = sbr.rel (0) target = $region29
  $region28: #{multimodal_stock_forward.1} parent=0 // pred_region
    _
  $region29: #{multimodal_stock_forward.1} parent=0 // pred_fallthru
    _
  // Predicated region
  $region30: #{multimodal_stock_forward.1} parent=0 // pred_check
    _
  $region31: #{multimodal_stock_forward.1} parent=0 // pred_check_branch
    %32 = sbr.rel (0) target = $region33
  $region32: #{multimodal_stock_forward.1} parent=0 // pred_region
    _
  $region33: #{multimodal_stock_forward.1} parent=0 // pred_fallthru
    _
  // Predicated region
  $region34: #{multimodal_stock_forward.1} parent=0 // pred_check
    _
  $region35: #{multimodal_stock_forward.1} parent=0 // pred_check_branch
    %34 = sbr.rel (0) target = $region37
  $region36: #{multimodal_stock_forward.1} parent=0 // pred_region
    _
  $region37: #{multimodal_stock_forward.1} parent=0 // pred_fallthru
    _
  // Predicated region
  $region38: #{multimodal_stock_forward.1} parent=0 // pred_check
    _
  $region39: #{multimodal_stock_forward.1} parent=0 // pred_check_branch
    %36 = sbr.rel (0) target = $region41
  $region40: #{multimodal_stock_forward.1} parent=0 // pred_region
    _
  $region41: #{multimodal_stock_forward.1} parent=0 // pred_fallthru
    _
  %v37 = vld [vmem:[%s6] sm:$0xff]
  %v38 = vld [vmem:[%s6 + $0x8] sm:$0xff]
  %v39 = vld [vmem:[%s6 + $0x10] sm:$0xff]
  %v40 = vld [vmem:[%s6 + $0x18] sm:$0xff]
  %v41 = vld [vmem:[%s6 + $0x20] sm:$0xff]
  %v42 = vld [vmem:[%s6 + $0x28] sm:$0xff]
  %v43 = vld [vmem:[%s6 + $0x30] sm:$0xff]
  %v44 = vld [vmem:[%s6 + $0x38] sm:$0xff]
  %v45 = vld [vmem:[%s6 + $0x40] sm:$0xff]
  %v46 = vld [vmem:[%s6 + $0x48] sm:$0xff]
  %v47 = vld [vmem:[%s6 + $0x50] sm:$0xff]
  %v48 = vld [vmem:[%s6 + $0x58] sm:$0xff]
  %v49 = vld [vmem:[%s6 + $0x60] sm:$0xff]
  %v50 = vld [vmem:[%s6 + $0x68] sm:$0xff]
  %v51 = vld [vmem:[%s6 + $0x70] sm:$0xff]
  %v52 = vld [vmem:[%s6 + $0x78] sm:$0xff]
  %v53 = vld [vmem:[%s8] sm:$0xff]
  %v54 = vld [vmem:[%s0] sm:$0xff]
  %v55 = vld [vmem:[%s0 + $0x8] sm:$0xff]
  %v56 = vld [vmem:[%s3] sm:$0xff]
  %v57 = vld [vmem:[%s3 + $0x8] sm:$0x7f]
  %v58 = vperm.slane %v53, 0
  %vm59 = vcmask 121856
  %v61 = vsel %vm59, %v54, 0
  %v64 = vsel %vm59, %v55, 0
  %vm66 = vcmask 1046528
  %v68 = vsel %vm66, %v57, 0
  %70 = vmatpush.msra.mxu0 0.0
  %71 = vmatpush.msra.mxu0 0.0
  %72 = vmatpush.msra.mxu0 0.0
  %73 = vmatpush.msra.mxu0 0.0
  %74 = vmatpush.msra.mxu0 0.0
  %75 = vmatpush.msra.mxu0 0.0
  %76 = vmatpush.msra.mxu0 0.0
  %77 = vmatpush.msra.mxu0 0.0
  %78 = vmatpush.msra.mxu0 0.0
  %79 = vmatpush.msra.mxu0 0.0
  %80 = vmatpush.msra.mxu0 0.0
  %81 = vmatpush.msra.mxu0 0.0
  %82 = vmatpush.msra.mxu0 0.0
  %83 = vmatpush.msra.mxu0 0.0
  %84 = vmatpush.msra.mxu0 %v68
  %85 = vmatpush.msra.mxu0 %v56
  %86 = vmatmul.f32.gmra.mxu0 %v61
  %v87 = vpop.f32.mrf.mxu0
  %v88 = vadd.f32 %v58, %v87
  %89 = vmatmul.f32.gmra.mxu0 %v64
  %v90 = vpop.f32.mrf.mxu0
  %v91 = vadd.f32 %v58, %v90
  %92 = vdwg.mxu0
  %v93 = vmax.f32 %v88, 0.0
  %v94 = vmax.f32 %v91, 0.0
  %v95 = vperm.slane %v53, 1
  %vm96 = vcmask 261120
  %v98 = vsel %vm96, %v93, 0
  %v101 = vsel %vm96, %v94, 0
  %103 = vmatpush.msra.mxu0 0.0
  %104 = vmatpush.msra.mxu0 0.0
  %105 = vmatpush.msra.mxu0 0.0
  %106 = vmatpush.msra.mxu0 0.0
  %107 = vmatpush.msra.mxu0 0.0
  %108 = vmatpush.msra.mxu0 0.0
  %109 = vmatpush.msra.mxu0 0.0
  %110 = vmatpush.msra.mxu0 0.0
  %111 = vmatpush.msra.mxu0 0.0
  %112 = vmatpush.msra.mxu0 0.0
  %113 = vmatpush.msra.mxu0 0.0
  %114 = vmatpush.msra.mxu0 0.0
  %115 = vmatpush.msra.mxu0 %v40
  %116 = vmatpush.msra.mxu0 %v39
  %117 = vmatpush.msra.mxu0 %v38
  %118 = vmatpush.msra.mxu0 %v37
  %119 = vmatmul.f32.gmra.mxu0 %v98
  %v120 = vpop.f32.mrf.mxu0
  %v121 = vadd.f32 %v95, %v120
  %122 = vmatmul.f32.gmra.mxu0 %v101
  %v123 = vpop.f32.mrf.mxu0
  %v124 = vadd.f32 %v95, %v123
  %125 = vdwg.mxu0
  %v126 = vld [vmem:[%s4] sm:$0xff]
  %v127 = vld [vmem:[%s4 + $0x8] sm:$0x3]
  %v128 = vld [vmem:[%s1] sm:$0x1]
  %v129 = vld [vmem:[%s1 + $0x1] sm:$0x1]
  %v130 = vperm.slane %v53, 2
  %133 = vst [vmem:[#allocation1] ss:$9 sm:$0xff] %v128
  %s134 = scalar_lea.vmem [#allocation1], 1
  %135 = vst [vmem:[%s134] ss:$9 sm:$0xff] %v129
  %v136 = vld [vmem:[#allocation1] sm:$0xff]
  %vm137 = vcmask 80896
  %v138 = vsel %vm137, %v136, 0
  %vm140 = vcmask 1041408
  %v142 = vsel %vm140, %v127, 0
  %144 = vmatpush.msra.mxu0 0.0
  %145 = vmatpush.msra.mxu0 0.0
  %146 = vmatpush.msra.mxu0 0.0
  %147 = vmatpush.msra.mxu0 0.0
  %148 = vmatpush.msra.mxu0 0.0
  %149 = vmatpush.msra.mxu0 0.0
  %150 = vmatpush.msra.mxu0 0.0
  %151 = vmatpush.msra.mxu0 0.0
  %152 = vmatpush.msra.mxu0 0.0
  %153 = vmatpush.msra.mxu0 0.0
  %154 = vmatpush.msra.mxu0 0.0
  %155 = vmatpush.msra.mxu0 0.0
  %156 = vmatpush.msra.mxu0 0.0
  %157 = vmatpush.msra.mxu0 0.0
  %158 = vmatpush.msra.mxu0 %v142
  %159 = vmatpush.msra.mxu0 %v126
  %160 = vmatmul.f32.gmra.mxu0 %v138
  %v161 = vpop.f32.mrf.mxu0
  %v162 = vadd.f32 %v130, %v161
  %163 = vdwg.mxu0
  %v164 = vmax.f32 %v162, 0.0
  %v165 = vperm.slane %v53, 3
  %v167 = vsel %vm96, %v164, 0
  %169 = vmatpush.msra.mxu0 0.0
  %170 = vmatpush.msra.mxu0 0.0
  %171 = vmatpush.msra.mxu0 0.0
  %172 = vmatpush.msra.mxu0 0.0
  %173 = vmatpush.msra.mxu0 0.0
  %174 = vmatpush.msra.mxu0 0.0
  %175 = vmatpush.msra.mxu0 0.0
  %176 = vmatpush.msra.mxu0 0.0
  %177 = vmatpush.msra.mxu0 0.0
  %178 = vmatpush.msra.mxu0 0.0
  %179 = vmatpush.msra.mxu0 0.0
  %180 = vmatpush.msra.mxu0 0.0
  %181 = vmatpush.msra.mxu0 %v44
  %182 = vmatpush.msra.mxu0 %v43
  %183 = vmatpush.msra.mxu0 %v42
  %184 = vmatpush.msra.mxu0 %v41
  %185 = vmatmul.f32.gmra.mxu0 %v167
  %v186 = vpop.f32.mrf.mxu0
  %v187 = vadd.f32 %v165, %v186
  %188 = vdwg.mxu0
  %v190 = vrot.slane %v187, 1
  %v191 = vperm.slane %v187, 0
  %v192 = vperm.slane %v190, 0
  %v195 = vld [vmem:[%s5] sm:$0xff]
  %v196 = vld [vmem:[%s2] sm:$0x1]
  %v197 = vld [vmem:[%s2 + $0x1] sm:$0x1]
  %v198 = vperm.slane %v53, 4
  %201 = vst [vmem:[#allocation1] ss:$9 sm:$0xff] %v196
  %s202 = scalar_lea.vmem [#allocation1], 1
  %203 = vst [vmem:[%s202] ss:$9 sm:$0xff] %v197
  %v204 = vld [vmem:[#allocation1] sm:$0xff]
  %vm205 = vcmask 64512
  %v206 = vsel %vm205, %v204, 0
  %208 = vmatpush.msra.mxu0 0.0
  %209 = vmatpush.msra.mxu0 0.0
  %210 = vmatpush.msra.mxu0 0.0
  %211 = vmatpush.msra.mxu0 0.0
  %212 = vmatpush.msra.mxu0 0.0
  %213 = vmatpush.msra.mxu0 0.0
  %214 = vmatpush.msra.mxu0 0.0
  %215 = vmatpush.msra.mxu0 0.0
  %216 = vmatpush.msra.mxu0 0.0
  %217 = vmatpush.msra.mxu0 0.0
  %218 = vmatpush.msra.mxu0 0.0
  %219 = vmatpush.msra.mxu0 0.0
  %220 = vmatpush.msra.mxu0 0.0
  %221 = vmatpush.msra.mxu0 0.0
  %222 = vmatpush.msra.mxu0 0.0
  %223 = vmatpush.msra.mxu0 %v195
  %224 = vmatmul.f32.gmra.mxu0 %v206
  %v225 = vpop.f32.mrf.mxu0
  %v226 = vadd.f32 %v198, %v225
  %227 = vdwg.mxu0
  %v228 = vmax.f32 %v226, 0.0
  %v229 = vperm.slane %v53, 5
  %v231 = vsel %vm96, %v228, 0
  %233 = vmatpush.msra.mxu0 0.0
  %234 = vmatpush.msra.mxu0 0.0
  %235 = vmatpush.msra.mxu0 0.0
  %236 = vmatpush.msra.mxu0 0.0
  %237 = vmatpush.msra.mxu0 0.0
  %238 = vmatpush.msra.mxu0 0.0
  %239 = vmatpush.msra.mxu0 0.0
  %240 = vmatpush.msra.mxu0 0.0
  %241 = vmatpush.msra.mxu0 0.0
  %242 = vmatpush.msra.mxu0 0.0
  %243 = vmatpush.msra.mxu0 0.0
  %244 = vmatpush.msra.mxu0 0.0
  %245 = vmatpush.msra.mxu0 %v48
  %246 = vmatpush.msra.mxu0 %v47
  %247 = vmatpush.msra.mxu0 %v46
  %248 = vmatpush.msra.mxu0 %v45
  %249 = vmatmul.f32.gmra.mxu0 %v231
  %v250 = vpop.f32.mrf.mxu0
  %v251 = vadd.f32 %v229, %v250
  %252 = vdwg.mxu0
  %v254 = vrot.slane %v251, 1
  %v255 = vperm.slane %v251, 0
  %v256 = vperm.slane %v254, 0
  %v259 = vmul.f32 %v121, %v121
  %v260 = vmul.f32 %v124, %v124
  %v261 = vsel %vm96, %v259, 0.0
  %262 = vadd.xlane.f32.xlu0 %v261
  %v263 = vpop.xlane.xlu0 %262
  %v264 = vsel %vm96, %v260, 0.0
  %265 = vadd.xlane.f32.xlu0 %v264
  %v266 = vpop.xlane.xlu0 %265
  %v267 = vmul.f32 %v263, 0.17677669
  %v268 = vmul.f32 %v266, 0.17677669
  %v269 = vmul.f32 %v121, %v191
  %v270 = vmul.f32 %v124, %v192
  %v271 = vsel %vm96, %v269, 0.0
  %272 = vadd.xlane.f32.xlu0 %v271
  %v273 = vpop.xlane.xlu0 %272
  %v274 = vsel %vm96, %v270, 0.0
  %275 = vadd.xlane.f32.xlu0 %v274
  %v276 = vpop.xlane.xlu0 %275
  %v277 = vmul.f32 %v273, 0.17677669
  %v278 = vmul.f32 %v276, 0.17677669
  %v279 = vmul.f32 %v121, %v255
  %v280 = vmul.f32 %v124, %v256
  %v281 = vsel %vm96, %v279, 0.0
  %282 = vadd.xlane.f32.xlu0 %v281
  %v283 = vpop.xlane.xlu0 %282
  %v284 = vsel %vm96, %v280, 0.0
  %285 = vadd.xlane.f32.xlu0 %v284
  %v286 = vpop.xlane.xlu0 %285
  %v287 = vmul.f32 %v283, 0.17677669
  %v288 = vmul.f32 %v286, 0.17677669
  %v289 = vmax.f32 %v267, %v277
  %v290 = vmax.f32 %v268, %v278
  %v291 = vmax.f32 %v289, %v287
  %v292 = vmax.f32 %v290, %v288
  %v293 = vsub.f32 %v267, %v291
  %v294 = vsub.f32 %v268, %v292
  %v295 = vmul.f32 %v293, 1.442695
  %v296 = vpow.pop %v295
  %v297 = vmul.f32 %v294, 1.442695
  %v298 = vpow.pop %v297
  %v299 = vsub.f32 %v277, %v291
  %v300 = vsub.f32 %v278, %v292
  %v301 = vmul.f32 %v299, 1.442695
  %v302 = vpow.pop %v301
  %v303 = vmul.f32 %v300, 1.442695
  %v304 = vpow.pop %v303
  %v305 = vsub.f32 %v287, %v291
  %v306 = vsub.f32 %v288, %v292
  %v307 = vmul.f32 %v305, 1.442695
  %v308 = vpow.pop %v307
  %v309 = vmul.f32 %v306, 1.442695
  %v310 = vpow.pop %v309
  %v311 = vadd.f32 %v296, %v302
  %v312 = vadd.f32 %v298, %v304
  %v313 = vadd.f32 %v311, %v308
  %v314 = vadd.f32 %v312, %v310
  %v315 = vrcp.pop %v313
  %v316 = vrcp.pop %v314
  %v317 = vmul.f32 %v296, %v121
  %v318 = vmul.f32 %v298, %v124
  %v319 = vmul.f32 %v302, %v191
  %v320 = vmul.f32 %v304, %v192
  %v321 = vadd.f32 %v317, %v319
  %v322 = vadd.f32 %v318, %v320
  %v323 = vmul.f32 %v308, %v255
  %v324 = vmul.f32 %v310, %v256
  %v325 = vadd.f32 %v321, %v323
  %v326 = vadd.f32 %v322, %v324
  %v327 = vmul.f32 %v325, %v315
  %v328 = vmul.f32 %v326, %v316
  %v329 = vperm.slane %v53, 6
  %v331 = vsel %vm96, %v327, 0
  %v334 = vsel %vm96, %v328, 0
  %336 = vmatpush.msra.mxu0 0.0
  %337 = vmatpush.msra.mxu0 0.0
  %338 = vmatpush.msra.mxu0 0.0
  %339 = vmatpush.msra.mxu0 0.0
  %340 = vmatpush.msra.mxu0 0.0
  %341 = vmatpush.msra.mxu0 0.0
  %342 = vmatpush.msra.mxu0 0.0
  %343 = vmatpush.msra.mxu0 0.0
  %344 = vmatpush.msra.mxu0 0.0
  %345 = vmatpush.msra.mxu0 0.0
  %346 = vmatpush.msra.mxu0 0.0
  %347 = vmatpush.msra.mxu0 0.0
  %348 = vmatpush.msra.mxu0 %v52
  %349 = vmatpush.msra.mxu0 %v51
  %350 = vmatpush.msra.mxu0 %v50
  %351 = vmatpush.msra.mxu0 %v49
  %352 = vmatmul.f32.gmra.mxu0 %v331
  %v353 = vpop.f32.mrf.mxu0
  %v354 = vadd.f32 %v329, %v353
  %355 = vmatmul.f32.gmra.mxu0 %v334
  %v356 = vpop.f32.mrf.mxu0
  %v357 = vadd.f32 %v329, %v356
  %358 = vdwg.mxu0
  %359 = vrot.lane.b32.xlu0 %v191, 32
  %v360 = vpop.permute.xlu0 %359
  %361 = vrot.lane.b32.xlu0 %v192, 32
  %v362 = vpop.permute.xlu0 %361
  %365 = vrot.lane.b32.xlu0 %v255, 64
  %v366 = vpop.permute.xlu0 %365
  %367 = vrot.lane.b32.xlu0 %v256, 64
  %v368 = vpop.permute.xlu0 %367
  %373 = vrot.lane.b32.xlu0 %v354, 96
  %v374 = vpop.permute.xlu0 %373
  %375 = vrot.lane.b32.xlu0 %v357, 96
  %v376 = vpop.permute.xlu0 %375
  %v379 = vsel %vm96, %v121, %v360
  %v380 = vsel %vm96, %v124, %v362
  %vm381 = vcmask 523264
  %v382 = vsel %vm381, %v379, %v366
  %v383 = vsel %vm381, %v380, %v368
  %vm384 = vcmask 785408
  %v385 = vsel %vm384, %v382, %v374
  %v386 = vsel %vm384, %v383, %v376
  %387 = vst [vmem:[%s10] sm:$0xff] %v385
  %388 = vst [vmem:[%s10 + $0x8] sm:$0xff] %v386
  %v389 = vld [vmem:[%s7] sm:$0xff]
  %v390 = vld [vmem:[%s7 + $0x8] sm:$0xff]
  %v391 = vld [vmem:[%s7 + $0x10] sm:$0xff]
  %v392 = vld [vmem:[%s7 + $0x18] sm:$0xff]
  %v393 = vld [vmem:[%s9] sm:$0x1]
  %v395 = vperm.slane %v393, 0
  %397 = vmatpush.msra.mxu0 0.0
  %398 = vmatpush.msra.mxu0 0.0
  %399 = vmatpush.msra.mxu0 0.0
  %400 = vmatpush.msra.mxu0 0.0
  %401 = vmatpush.msra.mxu0 0.0
  %402 = vmatpush.msra.mxu0 0.0
  %403 = vmatpush.msra.mxu0 0.0
  %404 = vmatpush.msra.mxu0 0.0
  %405 = vmatpush.msra.mxu0 0.0
  %406 = vmatpush.msra.mxu0 0.0
  %407 = vmatpush.msra.mxu0 0.0
  %408 = vmatpush.msra.mxu0 0.0
  %409 = vmatpush.msra.mxu0 %v392
  %410 = vmatpush.msra.mxu0 %v391
  %411 = vmatpush.msra.mxu0 %v390
  %412 = vmatpush.msra.mxu0 %v389
  %413 = vmatmul.f32.gmra.mxu0 %v331
  %v414 = vpop.f32.mrf.mxu0
  %v415 = vadd.f32 %v395, %v414
  %416 = vmatmul.f32.gmra.mxu0 %v334
  %v417 = vpop.f32.mrf.mxu0
  %v418 = vadd.f32 %v395, %v417
  %419 = vdwg.mxu0
  %vm420 = vcmask 31744
  %421 = vst.msk [vmem:[%s11] sm:$0xff] %vm420, %v415
  %422 = vst.msk [vmem:[%s11 + $0x8] sm:$0xff] %vm420, %v418
  // Predicated region
  $region42: #{multimodal_stock_forward.1} parent=0 // pred_check
    _
  $region43: #{multimodal_stock_forward.1} parent=0 // pred_check_branch
    %424 = sbr.rel (0) target = $region45
  $region44: #{multimodal_stock_forward.1} parent=0 // pred_region
    _
  $region45: #{multimodal_stock_forward.1} parent=0 // pred_fallthru
    _
  // Predicated region
  $region46: #{multimodal_stock_forward.1} parent=0 // pred_check
    _
  $region47: #{multimodal_stock_forward.1} parent=0 // pred_check_branch
    %426 = sbr.rel (0) target = $region49
  $region48: #{multimodal_stock_forward.1} parent=0 // pred_region
    _
  $region49: #{multimodal_stock_forward.1} parent=0 // pred_fallthru
    _
  // Predicated region
  $region50: #{multimodal_stock_forward.1} parent=0 // pred_check
    _
  $region51: #{multimodal_stock_forward.1} parent=0 // pred_check_branch
    %428 = sbr.rel (0) target = $region53
  $region52: #{multimodal_stock_forward.1} parent=0 // pred_region
    _
  $region53: #{multimodal_stock_forward.1} parent=0 // pred_fallthru
    _
  // Predicated region
  $region54: #{multimodal_stock_forward.1} parent=0 // pred_check
    _
  $region55: #{multimodal_stock_forward.1} parent=0 // pred_check_branch
    %430 = sbr.rel (0) target = $region57
  $region56: #{multimodal_stock_forward.1} parent=0 // pred_region
    _
  $region57: #{multimodal_stock_forward.1} parent=0 // pred_fallthru
    _

</llo_original>
